<compile_context>
chip_gen: v7x
topology: tpu7x:2x2x1
jax: 0.10.0
libtpu: 0.0.40
codegen_flags: <defaults>
</compile_context>

<pallas_src>
import math

import jax
import jax.numpy as jnp
from jax.experimental import pallas as pl
from jax.experimental.pallas import tpu as pltpu


# ---------------------------------------------------------------------------
# Kernels (shape-agnostic: they also run unchanged on the lane-folded layout)
# ---------------------------------------------------------------------------
def _temporal_decay_dense_kernel(delta_ref, w_ref, b_ref, out_ref):
    # delta_ref: (TILE_M, Fin)  w_ref: (Fin, Fout)  b_ref: (1, Fout)
    x = delta_ref[...]
    z = jnp.dot(x, w_ref[...], preferred_element_type=jnp.float32) + b_ref[...]
    # relu then exp(-.) -> values in (0, 1]; exp runs on the EUP slot
    out_ref[...] = jnp.exp(-jnp.maximum(z, 0.0)).astype(out_ref.dtype)


def _temporal_decay_diag_kernel(delta_ref, dw_ref, b_ref, out_ref):
    # diag mode: gamma = exp(-relu(delta * diag(W) + b))   (pure VPU + EUP)
    x = delta_ref[...].astype(jnp.float32)
    z = x * dw_ref[...] + b_ref[...]
    out_ref[...] = jnp.exp(-jnp.maximum(z, 0.0)).astype(out_ref.dtype)


# ---------------------------------------------------------------------------
# Wrapper helpers
# ---------------------------------------------------------------------------
def _round_up(x: int, m: int) -> int:
    return ((x + m - 1) // m) * m


def _fold_factor(f_in: int, M: int) -> int:
    """How many logical rows to pack into the 128-lane axis (free reshape)."""
    if f_in >= 128 or 128 % f_in != 0:
        return 1
    p = math.gcd(128 // f_in, M)      # power of two, divides M exactly
    while p > 1 and M // p < 8:       # keep at least a full sublane of rows
        p //= 2
    return max(p, 1)


def _choose_tile_rows(rows: int, fin: int, fout: int, itemsize: int,
                      *, step_bytes: int = 4 << 20,
                      vmem_budget: int = 24 << 20) -> int:
    """Rows per grid step: multiple of 8, ~step_bytes moved per step, working
    set VMEM-safe, and small enough that the grid keeps >= 2 steps (v7x)."""
    row_bytes = itemsize * (fin + fout)
    tile = max(8, (step_bytes // row_bytes) // 8 * 8)
    max_tile = max(8, (vmem_budget // (2 * row_bytes)) // 8 * 8)   # dbl-buffered in+out
    tile = min(tile, max_tile)
    tile = min(tile, max(8, _round_up(pl.cdiv(rows, 2), 8)))       # >= 2 grid steps
    tile = min(tile, _round_up(rows, 8))                           # don't exceed data
    return max(8, tile)


# ---------------------------------------------------------------------------
# Wrapper
# ---------------------------------------------------------------------------
def temporal_decay(delta, W, b, diag: bool = False, tile_m: int | None = None):
    """delta: [B, T, F_in], W: [F_out, F_in], b: [F_out] -> gamma: [B, T, F_out]."""
    B, T, F_in = delta.shape
    F_out = W.shape[0]
    M = B * T
    itemsize = jnp.dtype(delta.dtype).itemsize

    # ---- lane folding: pack P logical rows into one 128-wide row (free reshape)
    P = _fold_factor(F_in, M)
    rows = M // P
    fin, fout = F_in * P, F_out * P

    delta2d = delta.reshape(rows, fin)
    b2d = jnp.tile(jnp.asarray(b, jnp.float32).reshape(1, F_out), (1, P))

    if tile_m is None:
        tile_m = _choose_tile_rows(rows, fin, fout, itemsize)
    grid = (pl.cdiv(rows, tile_m),)   # no host padding: Pallas masks the ragged tail

    row_in_spec = pl.BlockSpec((tile_m, fin), lambda i: (i, 0))
    row_out_spec = pl.BlockSpec((tile_m, fout), lambda i: (i, 0))
    full_spec = lambda shape: pl.BlockSpec(shape, lambda i: (0, 0))  # noqa: E731

    if diag:
        assert F_in == F_out
        # diag(W)[j] = W[j, j]; W*eye collapses to a per-feature scale (no MXU).
        dw2d = jnp.tile(jnp.diagonal(W).reshape(1, F_in).astype(jnp.float32), (1, P))
        kernel = _temporal_decay_diag_kernel
        params = (dw2d, b2d)
        param_specs = [full_spec((1, fin)), full_spec((1, fout))]
        param_bytes = 4 * (fin + fout)
        flops = 2 * rows * fout
    else:
        # Pre-transposed weight; with folding, block-diagonal kron(I_P, W^T) so a
        # single 128-wide MXU contraction computes P logical rows at once.
        Wt = jnp.asarray(W, jnp.float32).T                      # (F_in, F_out)
        if P > 1:
            Wt = jnp.kron(jnp.eye(P, dtype=jnp.float32), Wt)    # (fin, fout)
        kernel = _temporal_decay_dense_kernel
        params = (Wt, b2d)
        param_specs = [full_spec((fin, fout)), full_spec((1, fout))]
        param_bytes = 4 * (fin * fout + fout)
        flops = 2 * rows * fin * fout

    cost = pl.CostEstimate(
        flops=int(flops),
        transcendentals=int(rows * fout),
        bytes_accessed=int(itemsize * rows * (fin + fout) + param_bytes),
    )

    # VMEM limit from the actual working set (double-buffered in+out + params),
    # capped at 32 MiB so it is always safe on v7x's smaller VMEM.
    working_set = 2 * itemsize * tile_m * (fin + fout) + param_bytes
    vmem_limit = int(min(32 << 20, max(4 << 20, 2 * working_set)))

    out = pl.pallas_call(
        kernel,
        out_shape=jax.ShapeDtypeStruct((rows, fout), delta.dtype),
        grid=grid,
        in_specs=[row_in_spec] + param_specs,
        out_specs=row_out_spec,
        compiler_params=pltpu.CompilerParams(
            dimension_semantics=("parallel",),   # shard rows across TCs on v7x
            vmem_limit_bytes=vmem_limit,
        ),
        cost_estimate=cost,
    )(delta2d, *params)

    # Unfold is a free reshape (contiguous row-major layout).
    return out.reshape(B, T, F_out)


# ---------------------------------------------------------------------------
# Self-test
# ---------------------------------------------------------------------------
if __name__ == "__main__":
    def ref_dense(d, W, b):
        z = jnp.einsum("btf,of->bto", d.astype(jnp.float32), W) + b
        return jnp.exp(-jnp.maximum(z, 0.0))

    def ref_diag(d, W, b):
        z = d.astype(jnp.float32) * jnp.diagonal(W) + b
        return jnp.exp(-jnp.maximum(z, 0.0))

    key = jax.random.PRNGKey(0)
    k_delta, k_w, k_b = jax.random.split(key, 3)

    # --- small shapes consistent with the module: [n_samples=2, n_steps=8, F=32]
    B, T, F_in, F_out = 2, 8, 32, 32
    std_dev = 1.0 / math.sqrt(F_out)
    W = jax.random.uniform(k_w, (F_out, F_in), jnp.float32, -std_dev, std_dev)
    b = jax.random.uniform(k_b, (F_out,), jnp.float32, -std_dev, std_dev)
    delta = jax.random.uniform(k_delta, (B, T, F_in), jnp.float32, 0.0, 5.0)

    gamma = jax.block_until_ready(temporal_decay(delta, W, b, diag=False))
    gamma_diag = jax.block_until_ready(temporal_decay(delta, W, b, diag=True))
    assert gamma.shape == (B, T, F_out)
    assert gamma_diag.shape == (B, T, F_out)
    assert jnp.allclose(gamma, ref_dense(delta, W, b), atol=1e-5, rtol=1e-5)
    assert jnp.allclose(gamma_diag, ref_diag(delta, W, b), atol=1e-5, rtol=1e-5)

    # --- larger M: folded layout, multi-step grid with a ragged last block
    B2, T2 = 4, 300  # M = 1200 -> 300 folded rows, 2 grid steps, ragged tail
    delta_big = jax.random.uniform(k_delta, (B2, T2, F_in), jnp.float32, 0.0, 5.0)
    gamma_big = jax.block_until_ready(temporal_decay(delta_big, W, b, diag=False))
    assert jnp.allclose(gamma_big, ref_dense(delta_big, W, b), atol=1e-5, rtol=1e-5)
    gamma_big_d = jax.block_until_ready(temporal_decay(delta_big, W, b, diag=True))
    assert jnp.allclose(gamma_big_d, ref_diag(delta_big, W, b), atol=1e-5, rtol=1e-5)

    # --- non-foldable feature size + odd M: P=1 fallback, ragged grid
    B3, T3, Fi3, Fo3 = 3, 5, 48, 16
    W3 = jax.random.uniform(k_w, (Fo3, Fi3), jnp.float32, -std_dev, std_dev)
    b3 = jax.random.uniform(k_b, (Fo3,), jnp.float32, -std_dev, std_dev)
    delta3 = jax.random.uniform(k_delta, (B3, T3, Fi3), jnp.float32, 0.0, 5.0)
    gamma3 = jax.block_until_ready(temporal_decay(delta3, W3, b3, diag=False))
    assert jnp.allclose(gamma3, ref_dense(delta3, W3, b3), atol=1e-5, rtol=1e-5)

    # --- bf16 delta stays bf16 over HBM; f32 accumulation in-kernel
    delta_bf16 = delta.astype(jnp.bfloat16)
    gamma_bf16 = jax.block_until_ready(temporal_decay(delta_bf16, W, b, diag=False))
    assert gamma_bf16.dtype == jnp.bfloat16
    assert jnp.allclose(gamma_bf16.astype(jnp.float32),
                        ref_dense(delta_bf16, W, b), atol=2e-2, rtol=2e-2)

    print("KERNEL_OK")
</pallas_src>

<mosaic_0001>
module attributes {stable_mosaic.version = 11 : i64} {
  func.func @_temporal_decay_dense_kernel(%arg0: i32, %arg1: memref<8x64xf32, #tpu.memory_space<vmem>>, %arg2: memref<64x64xf32, #tpu.memory_space<vmem>>, %arg3: memref<1x64xf32, #tpu.memory_space<vmem>>, %arg4: memref<8x64xf32, #tpu.memory_space<vmem>>) attributes {dimension_semantics = [#tpu.dimension_semantics<parallel>], iteration_bounds = array<i64: 1>, scalar_prefetch = 0 : i64, scratch_operands = 0 : i64, tpu.core_type = #tpu.core_type<tc>, window_params = [{transform_indices = @transform_0, window_bounds = array<i64: 8, 64>}, {pipeline_mode = #tpu.pipeline_mode<synchronous>, transform_indices = @transform_1, window_bounds = array<i64: 64, 64>}, {pipeline_mode = #tpu.pipeline_mode<synchronous>, transform_indices = @transform_2, window_bounds = array<i64: 1, 64>}, {transform_indices = @transform_3, window_bounds = array<i64: 8, 64>}]} {
    %c0 = arith.constant 0 : index
    %c0_0 = arith.constant 0 : index
    %0 = vector.load %arg1[%c0, %c0_0] : memref<8x64xf32, #tpu.memory_space<vmem>>, vector<8x64xf32>
    %c0_1 = arith.constant 0 : index
    %c0_2 = arith.constant 0 : index
    %1 = vector.load %arg2[%c0_1, %c0_2] : memref<64x64xf32, #tpu.memory_space<vmem>>, vector<64x64xf32>
    %cst = arith.constant dense<0.000000e+00> : vector<8x64xf32>
    %2 = tpu.matmul %0, %1, %cst {dimension_numbers = #tpu.dot_dimension_numbers<[1], [0], [0], [1], [0, 0, 1, 1], [], []>} : vector<8x64xf32>, vector<64x64xf32>, vector<8x64xf32> -> vector<8x64xf32>
    %c0_3 = arith.constant 0 : index
    %c0_4 = arith.constant 0 : index
    %3 = vector.load %arg3[%c0_3, %c0_4] : memref<1x64xf32, #tpu.memory_space<vmem>>, vector<1x64xf32>
    %4 = vector.broadcast %3 : vector<1x64xf32> to vector<8x64xf32>
    %5 = arith.addf %2, %4 : vector<8x64xf32>
    %cst_5 = arith.constant 0.000000e+00 : f32
    %6 = vector.broadcast %cst_5 : f32 to vector<8x64xf32>
    %7 = arith.maximumf %5, %6 : vector<8x64xf32>
    %cst_6 = arith.constant 0.000000e+00 : f32
    %8 = vector.broadcast %cst_6 : f32 to vector<8x64xf32>
    %9 = arith.subf %8, %7 : vector<8x64xf32>
    %10 = math.exp %9 : vector<8x64xf32>
    %c0_7 = arith.constant 0 : index
    %c0_8 = arith.constant 0 : index
    %11 = vector.load %arg4[%c0_7, %c0_8] : memref<8x64xf32, #tpu.memory_space<vmem>>, vector<8x64xf32>
    tpu.vector_store %arg4[%c0_7, %c0_8], %10 {strides = array<i32>} : memref<8x64xf32, #tpu.memory_space<vmem>>, vector<8x64xf32>,
    return
  }
  func.func @transform_0(%arg0: i32) -> (i32, i32) {
    %c0_i32 = arith.constant 0 : i32
    %c0_i32_0 = arith.constant 0 : i32
    return %arg0, %c0_i32 : i32, i32
  }
  func.func @transform_1(%arg0: i32) -> (i32, i32) {
    %c0_i32 = arith.constant 0 : i32
    %c0_i32_0 = arith.constant 0 : i32
    %c0_i32_1 = arith.constant 0 : i32
    return %c0_i32, %c0_i32_0 : i32, i32
  }
  func.func @transform_2(%arg0: i32) -> (i32, i32) {
    %c0_i32 = arith.constant 0 : i32
    %c0_i32_0 = arith.constant 0 : i32
    %c0_i32_1 = arith.constant 0 : i32
    return %c0_i32, %c0_i32_0 : i32, i32
  }
  func.func @transform_3(%arg0: i32) -> (i32, i32) {
    %c0_i32 = arith.constant 0 : i32
    %c0_i32_0 = arith.constant 0 : i32
    return %arg0, %c0_i32 : i32, i32
  }
}

</mosaic_0001>

<llo_original>
// kernel: tpu_custom_call.1
$region0: #{tpu_custom_call.1}
  #allocation0 [shape = 'u32[]', space=smem, size = 0x4, offset = 0x4, fixed_abs, tag = 'smem constant byte address 0x4 - core index']
  #allocation1 [shape = 'u32[144,128]{1,0:T(1,128)}', space=vmem, size = 0x12000, scoped, tag = 'internal scratch']
  %s0 = inlined_call_operand.hbm [shape: f32[8,64], index: 0, kind: input, shape index: {}]
  %s1 = inlined_call_operand.hbm [shape: f32[64,64], index: 1, kind: input, shape index: {}]
  %s2 = inlined_call_operand.vmem [shape: f32[1,64], index: 2, kind: input, shape index: {}]
  %s3 = inlined_call_operand.hbm [shape: f32[8,64], index: 3, kind: output, shape index: {}]
  %s4 = sld [smem:[#allocation0]]
  $region30: #{tpu_custom_call.1} parent=0
    _
  %s6 = ssub.s32 1, %s4
  %s7 = scalar_select 0, %s6, %s4
  $region1: #{tpu_custom_call.1} parent=0
    #allocation2 [shape = 'u8[4096]{0}', space=vmem, size = 0x1000, scoped, tag = 'input window, operand 0, single buffered']
    #allocation3 [shape = 's32[1]{0}', space=sflag, size = 0x4, scoped, tag = 'scoped memory for tpu_custom_call.1']
    #allocation4 [shape = 's32[1]{0}', space=sflag, size = 0x4, scoped, tag = 'scoped memory for tpu_custom_call.1']
    #allocation5 [shape = 'u8[32768]{0}', space=vmem, size = 0x8000, scoped, tag = 'input window, operand 1, single buffered']
    #allocation6 [shape = 's32[1]{0}', space=sflag, size = 0x4, scoped, tag = 'scoped memory for tpu_custom_call.1']
    #allocation7 [shape = 'u8[4096]{0}', space=vmem, size = 0x1000, scoped, tag = 'output window, operand 0, single buffered']
    %8 = vsyncpa [#allocation3], 0
    %9 = vsyncpa [#allocation6], 0
    %10 = vsyncpa [#allocation4], 0
    // Predicated region
    $region2: #{tpu_custom_call.1} parent=1 // pred_check
      _
    $region3: #{tpu_custom_call.1} parent=1 // pred_check_branch
      %12 = sbr.rel (0) target = $region5
    $region4: #{tpu_custom_call.1} parent=1 // pred_region
      %s14 = ssub.s32 128, 128
      %15 = vsyncadd [#allocation3], %s14
      %s17 = sshll.u32 [#allocation2], 4
      %s18 = int_to_ptr.vmem [resolvable:$true] %s17
      %20 = dma.hbm_to_vmem [thread:$0]  %s0, 128, %s18, [#allocation3]
    $region5: #{tpu_custom_call.1} parent=1 // pred_fallthru
      _
    // Predicated region
    $region6: #{tpu_custom_call.1} parent=1 // pred_check
      _
    $region7: #{tpu_custom_call.1} parent=1 // pred_check_branch
      %22 = sbr.rel (0) target = $region9
    $region8: #{tpu_custom_call.1} parent=1 // pred_region
      %s24 = ssub.s32 1024, 1024
      %25 = vsyncadd [#allocation6], %s24
      %s26 = sshll.u32 [#allocation5], 4
      %s27 = int_to_ptr.vmem [resolvable:$true] %s26
      %32 = dma.hbm_to_vmem [thread:$0]  %s1, 1024, %s27, [#allocation6], 128, 128, 8
    $region9: #{tpu_custom_call.1} parent=1 // pred_fallthru
      _
    // Predicated region
    $region10: #{tpu_custom_call.1} parent=1 // pred_check
      _
    $region11: #{tpu_custom_call.1} parent=1 // pred_check_branch
      %34 = sbr.rel (0) target = $region13
    $region12: #{tpu_custom_call.1} parent=1 // pred_region
      _
    $region13: #{tpu_custom_call.1} parent=1 // pred_fallthru
      _
    // Predicated region
    $region14: #{tpu_custom_call.1} parent=1 // pred_check
      _
    $region15: #{tpu_custom_call.1} parent=1 // pred_check_branch
      %36 = sbr.rel (0) target = $region17
    $region16: #{tpu_custom_call.1} parent=1 // pred_region
      %37 = dma.done [#allocation3], 128
    $region17: #{tpu_custom_call.1} parent=1 // pred_fallthru
      _
    // Predicated region
    $region18: #{tpu_custom_call.1} parent=1 // pred_check
      _
    $region19: #{tpu_custom_call.1} parent=1 // pred_check_branch
      %39 = sbr.rel (0) target = $region21
    $region20: #{tpu_custom_call.1} parent=1 // pred_region
      %40 = dma.done [#allocation6], 1024
    $region21: #{tpu_custom_call.1} parent=1 // pred_fallthru
      _
    %v41 = vld [vmem:[#allocation2] sm:$0xff]
    %v42 = vld [vmem:[#allocation5] sm:$0xff]
    %v43 = vld [vmem:[#allocation5 + $0x8] sm:$0xff]
    %v44 = vld [vmem:[#allocation5 + $0x10] sm:$0xff]
    %v45 = vld [vmem:[#allocation5 + $0x18] sm:$0xff]
    %v46 = vld [vmem:[#allocation5 + $0x20] sm:$0xff]
    %v47 = vld [vmem:[#allocation5 + $0x28] sm:$0xff]
    %v48 = vld [vmem:[#allocation5 + $0x30] sm:$0xff]
    %v49 = vld [vmem:[#allocation5 + $0x38] sm:$0xff]
    %v50 = vld [vmem:[%s2] sm:$0x1]
    %v52 = vlaneseq
    %v53 = vshrl.u32 %v52, 7
    %v54 = vsub.s32 0, %v53
    %v55 = vrot.slane %v50, %v54
    %vm57 = vcmask 523264
    %v59 = vsel %vm57, %v41, 0
    %61 = vmatprep.subr.mxu0 0.0
    %62 = vmatpush1.msra.mxu0 %v42
    %63 = vmatprep.subr.mxu0 0.0
    %64 = vmatpush1.msra.mxu0 %v43
    %65 = vmatprep.subr.mxu0 0.0
    %66 = vmatpush1.msra.mxu0 %v44
    %67 = vmatprep.subr.mxu0 0.0
    %68 = vmatpush1.msra.mxu0 %v45
    %69 = vmatprep.subr.mxu0 0.0
    %70 = vmatpush1.msra.mxu0 %v46
    %71 = vmatprep.subr.mxu0 0.0
    %72 = vmatpush1.msra.mxu0 %v47
    %73 = vmatprep.subr.mxu0 0.0
    %74 = vmatpush1.msra.mxu0 %v48
    %75 = vmatprep.subr.mxu0 0.0
    %76 = vmatpush1.msra.mxu0 %v49
    %77 = vmatprep.subr.mxu0 0.0
    %78 = vmatpush1.msra.mxu0 0.0
    %79 = vmatprep.subr.mxu0 0.0
    %80 = vmatpush1.msra.mxu0 0.0
    %81 = vmatprep.subr.mxu0 0.0
    %82 = vmatpush1.msra.mxu0 0.0
    %83 = vmatprep.subr.mxu0 0.0
    %84 = vmatpush1.msra.mxu0 0.0
    %85 = vmatprep.subr.mxu0 0.0
    %86 = vmatpush1.msra.mxu0 0.0
    %87 = vmatprep.subr.mxu0 0.0
    %88 = vmatpush1.msra.mxu0 0.0
    %89 = vmatprep.subr.mxu0 0.0
    %90 = vmatpush1.msra.mxu0 0.0
    %91 = vmatprep.subr.mxu0 0.0
    %92 = vmatpush1.msra.mxu0 0.0
    %93 = vmatprep.subr.mxu0 0.0
    %94 = vmatpush1.msra.mxu0 0.0
    %95 = vmatprep.subr.mxu0 0.0
    %96 = vmatpush1.msra.mxu0 0.0
    %97 = vmatprep.subr.mxu0 0.0
    %98 = vmatpush1.msra.mxu0 0.0
    %99 = vmatprep.subr.mxu0 0.0
    %100 = vmatpush1.msra.mxu0 0.0
    %101 = vmatprep.subr.mxu0 0.0
    %102 = vmatpush1.msra.mxu0 0.0
    %103 = vmatprep.subr.mxu0 0.0
    %104 = vmatpush1.msra.mxu0 0.0
    %105 = vmatprep.subr.mxu0 0.0
    %106 = vmatpush1.msra.mxu0 0.0
    %107 = vmatprep.subr.mxu0 0.0
    %108 = vmatpush1.msra.mxu0 0.0
    %109 = vmatprep.subr.mxu0 0.0
    %110 = vmatpush1.msra.mxu0 0.0
    %111 = vmatprep.subr.mxu0 0.0
    %112 = vmatpush1.msra.mxu0 0.0
    %113 = vmatprep.subr.mxu0 0.0
    %114 = vmatpush1.msra.mxu0 0.0
    %115 = vmatprep.subr.mxu0 0.0
    %116 = vmatpush1.msra.mxu0 0.0
    %117 = vmatprep.subr.mxu0 0.0
    %118 = vmatpush1.msra.mxu0 0.0
    %119 = vmatprep.subr.mxu0 0.0
    %120 = vmatpush1.msra.mxu0 0.0
    %121 = vmatprep.subr.mxu0 0.0
    %122 = vmatpush1.msra.mxu0 0.0
    %123 = vmatprep.subr.mxu0 0.0
    %124 = vmatpush1.msra.mxu0 0.0
    %125 = vmatprep.mubr.f32.mxu0 0.0
    %126 = vmatmul.mubr.f32.gmra.mrb[0].mxu0 %v59
    %v127 = vpop.f32.mrb[0].mxu0
    %v128 = vadd.f32 %v55, %v127
    %v129 = vpop.f32.mrb[0].mxu0
    %130 = vdwg.mxu0
    %v131 = vmax.f32 %v128, 0.0
    %v132 = vsub.f32 0.0, %v131
    %v133 = vmul.f32 %v132, 1.442695
    %v134 = vpow.pop %v133
    %135 = vst.msk [vmem:[#allocation7] sm:$0xff] %vm57, %v134
    // Predicated region
    $region22: #{tpu_custom_call.1} parent=1 // pred_check
      _
    $region23: #{tpu_custom_call.1} parent=1 // pred_check_branch
      %137 = sbr.rel (0) target = $region25
    $region24: #{tpu_custom_call.1} parent=1 // pred_region
      %s139 = ssub.s32 128, 128
      %140 = vsyncadd [#allocation4], %s139
      %s142 = sshll.u32 [#allocation7], 4
      %s143 = int_to_ptr.vmem [resolvable:$true] %s142
      %145 = dma.vmem_to_hbm [thread:$0]  %s143, 128, %s3, [#allocation4]
    $region25: #{tpu_custom_call.1} parent=1 // pred_fallthru
      _
    // Predicated region
    $region26: #{tpu_custom_call.1} parent=1 // pred_check
      _
    $region27: #{tpu_custom_call.1} parent=1 // pred_check_branch
      %147 = sbr.rel (0) target = $region29
    $region28: #{tpu_custom_call.1} parent=1 // pred_region
      %148 = dma.done [#allocation4], 128
    $region29: #{tpu_custom_call.1} parent=1 // pred_fallthru
      _
    %149 = vsyncpa [#allocation3], 1
    %150 = vsyncpa [#allocation6], 1
    %151 = vsyncpa [#allocation4], 1

</llo_original>
